<compile_context>
chip_gen: v6e
topology: v6e:2x2x1
jax: 0.10.0
libtpu: 0.0.40
codegen_flags: <defaults>
</compile_context>

<pallas_src>
import jax
import jax.numpy as jnp
from jax.experimental import pallas as pl
from jax.experimental.pallas import tpu as pltpu


def _mlp_kernel(w1_ref, b1_ref, w2_ref, b2_ref, x_ref, o_ref):
    """x_ref: [2, TB] VMEM, o_ref: [3, TB] VMEM, params in SMEM.

    Per batch column b:
        h_j = tanh(sum_k w1[k, j] * x[k, b] + b1[j])      j in 0..2
        y_j = sigmoid(sum_k w2[k, j] * h_k    + b2[j])    j in 0..2
    entirely with unrolled scalar-broadcast FMAs on the VPU (no MXU).
    """
    x0 = x_ref[0:1, :]  # [1, TB]
    x1 = x_ref[1:2, :]  # [1, TB]

    # Layer 1: Linear(2, 3) + Tanh  (6 FMAs + 3 tanh per column)
    h = []
    for j in range(3):
        acc = w1_ref[0, j] * x0 + w1_ref[1, j] * x1 + b1_ref[j]
        h.append(jnp.tanh(acc))

    # Layer 2: Linear(3, 3) + Sigmoid  (9 FMAs + 3 sigmoid per column)
    for j in range(3):
        acc = (w2_ref[0, j] * h[0]
               + w2_ref[1, j] * h[1]
               + w2_ref[2, j] * h[2]
               + b2_ref[j])
        o_ref[j:j + 1, :] = jax.nn.sigmoid(acc)


def _round_up(n, m):
    return ((n + m - 1) // m) * m


def neural_network_forward(x, w1, b1, w2, b2, *, tb=1024):
    """x: [B, 2] float32. Returns [B, 3] float32.

    Weights are stored [in_features, out_features]; biases are 1-D [3].
    """
    B = x.shape[0]
    # Adaptive lane tile: a multiple of 128, no larger than needed, no
    # larger than `tb` (keeps per-step VMEM tiny and grid overhead amortized).
    tb_eff = min(tb, _round_up(B, 128))
    Bp = _round_up(B, tb_eff)

    # Transpose (+ zero-pad) in the wrapper so the kernel sees a lane-dense
    # [features, batch] layout.
    x_t = jnp.zeros((2, Bp), jnp.float32).at[:, :B].set(x.astype(jnp.float32).T)

    out_t = pl.pallas_call(
        _mlp_kernel,
        out_shape=jax.ShapeDtypeStruct((3, Bp), jnp.float32),
        grid=(Bp // tb_eff,),
        in_specs=[
            pl.BlockSpec(memory_space=pltpu.SMEM),           # w1 [2, 3] scalars
            pl.BlockSpec(memory_space=pltpu.SMEM),           # b1 [3]    scalars
            pl.BlockSpec(memory_space=pltpu.SMEM),           # w2 [3, 3] scalars
            pl.BlockSpec(memory_space=pltpu.SMEM),           # b2 [3]    scalars
            pl.BlockSpec((2, tb_eff), lambda i: (0, i)),     # x  tiled on lanes
        ],
        out_specs=pl.BlockSpec((3, tb_eff), lambda i: (0, i)),  # lane-dense out
        compiler_params=pltpu.CompilerParams(
            dimension_semantics=("parallel",)),
    )(w1, b1, w2, b2, x_t)

    return out_t[:, :B].T


def init_params(key):
    """Deterministic init mimicking PyTorch nn.Linear default
    (uniform(-1/sqrt(fan_in), 1/sqrt(fan_in)))."""
    k1, k2, k3, k4 = jax.random.split(key, 4)
    bound1 = 1.0 / jnp.sqrt(2.0)  # fan_in = 2
    bound2 = 1.0 / jnp.sqrt(3.0)  # fan_in = 3
    # Stored as [in_features, out_features] (transposed vs torch's [out, in]).
    w1 = jax.random.uniform(k1, (2, 3), jnp.float32, -bound1, bound1)
    b1 = jax.random.uniform(k2, (3,), jnp.float32, -bound1, bound1)
    w2 = jax.random.uniform(k3, (3, 3), jnp.float32, -bound2, bound2)
    b2 = jax.random.uniform(k4, (3,), jnp.float32, -bound2, bound2)
    return w1, b1, w2, b2


def reference_forward(x, w1, b1, w2, b2):
    h = jnp.tanh(x @ w1 + b1)
    return jax.nn.sigmoid(h @ w2 + b2)


if __name__ == "__main__":
    key = jax.random.PRNGKey(0)
    kx, kx2, kp = jax.random.split(key, 3)
    w1, b1, w2, b2 = init_params(kp)

    # Small shape consistent with the module (Linear expects last dim = 2).
    batch = 8
    x = jax.random.normal(kx, (batch, 2), dtype=jnp.float32)
    out = jax.block_until_ready(neural_network_forward(x, w1, b1, w2, b2))
    ref = reference_forward(x, w1, b1, w2, b2)
    assert out.shape == (batch, 3)
    assert jnp.allclose(out, ref, atol=1e-5, rtol=1e-5)

    # Second check exercising the multi-step grid + padding path
    # (5000 -> Bp=5120 with tb_eff=1024 -> 5 grid steps).
    batch2 = 5000
    x2 = jax.random.normal(kx2, (batch2, 2), dtype=jnp.float32)
    out2 = jax.block_until_ready(neural_network_forward(x2, w1, b1, w2, b2))
    ref2 = reference_forward(x2, w1, b1, w2, b2)
    assert out2.shape == (batch2, 3)
    assert jnp.allclose(out2, ref2, atol=1e-5, rtol=1e-5)

    print("KERNEL_OK")
</pallas_src>

<mosaic_0001>
module attributes {stable_mosaic.version = 11 : i64} {
  func.func @_mlp_kernel(%arg0: i32, %arg1: memref<2x3xf32, #tpu.memory_space<smem>>, %arg2: memref<3xf32, #tpu.memory_space<smem>>, %arg3: memref<3x3xf32, #tpu.memory_space<smem>>, %arg4: memref<3xf32, #tpu.memory_space<smem>>, %arg5: memref<2x128xf32, #tpu.memory_space<vmem>>, %arg6: memref<3x128xf32, #tpu.memory_space<vmem>>) attributes {dimension_semantics = [#tpu.dimension_semantics<parallel>], iteration_bounds = array<i64: 1>, scalar_prefetch = 0 : i64, scratch_operands = 0 : i64, tpu.core_type = #tpu.core_type<tc>, window_params = [{transform_indices = @transform_0, window_bounds = array<i64: 2, 3>}, {transform_indices = @transform_1, window_bounds = array<i64: 3>}, {transform_indices = @transform_2, window_bounds = array<i64: 3, 3>}, {transform_indices = @transform_3, window_bounds = array<i64: 3>}, {transform_indices = @transform_4, window_bounds = array<i64: 2, 128>}, {transform_indices = @transform_5, window_bounds = array<i64: 3, 128>}]} {
    %c0 = arith.constant 0 : index
    %c0_0 = arith.constant 0 : index
    %0 = vector.load %arg5[%c0, %c0_0] : memref<2x128xf32, #tpu.memory_space<vmem>>, vector<1x128xf32>
    %c1 = arith.constant 1 : index
    %c0_1 = arith.constant 0 : index
    %1 = vector.load %arg5[%c1, %c0_1] : memref<2x128xf32, #tpu.memory_space<vmem>>, vector<1x128xf32>
    %c0_2 = arith.constant 0 : index
    %c0_3 = arith.constant 0 : index
    %2 = memref.load %arg1[%c0_2, %c0_3] : memref<2x3xf32, #tpu.memory_space<smem>>
    %3 = vector.broadcast %2 : f32 to vector<1x128xf32>
    %4 = arith.mulf %3, %0 : vector<1x128xf32>
    %c1_4 = arith.constant 1 : index
    %c0_5 = arith.constant 0 : index
    %5 = memref.load %arg1[%c1_4, %c0_5] : memref<2x3xf32, #tpu.memory_space<smem>>
    %6 = vector.broadcast %5 : f32 to vector<1x128xf32>
    %7 = arith.mulf %6, %1 : vector<1x128xf32>
    %8 = arith.addf %4, %7 : vector<1x128xf32>
    %c0_6 = arith.constant 0 : index
    %9 = memref.load %arg2[%c0_6] : memref<3xf32, #tpu.memory_space<smem>>
    %10 = vector.broadcast %9 : f32 to vector<1x128xf32>
    %11 = arith.addf %8, %10 : vector<1x128xf32>
    %12 = math.tanh %11 : vector<1x128xf32>
    %c0_7 = arith.constant 0 : index
    %c1_8 = arith.constant 1 : index
    %13 = memref.load %arg1[%c0_7, %c1_8] : memref<2x3xf32, #tpu.memory_space<smem>>
    %14 = vector.broadcast %13 : f32 to vector<1x128xf32>
    %15 = arith.mulf %14, %0 : vector<1x128xf32>
    %c1_9 = arith.constant 1 : index
    %c1_10 = arith.constant 1 : index
    %16 = memref.load %arg1[%c1_9, %c1_10] : memref<2x3xf32, #tpu.memory_space<smem>>
    %17 = vector.broadcast %16 : f32 to vector<1x128xf32>
    %18 = arith.mulf %17, %1 : vector<1x128xf32>
    %19 = arith.addf %15, %18 : vector<1x128xf32>
    %c1_11 = arith.constant 1 : index
    %20 = memref.load %arg2[%c1_11] : memref<3xf32, #tpu.memory_space<smem>>
    %21 = vector.broadcast %20 : f32 to vector<1x128xf32>
    %22 = arith.addf %19, %21 : vector<1x128xf32>
    %23 = math.tanh %22 : vector<1x128xf32>
    %c0_12 = arith.constant 0 : index
    %c2 = arith.constant 2 : index
    %24 = memref.load %arg1[%c0_12, %c2] : memref<2x3xf32, #tpu.memory_space<smem>>
    %25 = vector.broadcast %24 : f32 to vector<1x128xf32>
    %26 = arith.mulf %25, %0 : vector<1x128xf32>
    %c1_13 = arith.constant 1 : index
    %c2_14 = arith.constant 2 : index
    %27 = memref.load %arg1[%c1_13, %c2_14] : memref<2x3xf32, #tpu.memory_space<smem>>
    %28 = vector.broadcast %27 : f32 to vector<1x128xf32>
    %29 = arith.mulf %28, %1 : vector<1x128xf32>
    %30 = arith.addf %26, %29 : vector<1x128xf32>
    %c2_15 = arith.constant 2 : index
    %31 = memref.load %arg2[%c2_15] : memref<3xf32, #tpu.memory_space<smem>>
    %32 = vector.broadcast %31 : f32 to vector<1x128xf32>
    %33 = arith.addf %30, %32 : vector<1x128xf32>
    %34 = math.tanh %33 : vector<1x128xf32>
    %c0_16 = arith.constant 0 : index
    %c0_17 = arith.constant 0 : index
    %35 = memref.load %arg3[%c0_16, %c0_17] : memref<3x3xf32, #tpu.memory_space<smem>>
    %36 = vector.broadcast %35 : f32 to vector<1x128xf32>
    %37 = arith.mulf %36, %12 : vector<1x128xf32>
    %c1_18 = arith.constant 1 : index
    %c0_19 = arith.constant 0 : index
    %38 = memref.load %arg3[%c1_18, %c0_19] : memref<3x3xf32, #tpu.memory_space<smem>>
    %39 = vector.broadcast %38 : f32 to vector<1x128xf32>
    %40 = arith.mulf %39, %23 : vector<1x128xf32>
    %41 = arith.addf %37, %40 : vector<1x128xf32>
    %c2_20 = arith.constant 2 : index
    %c0_21 = arith.constant 0 : index
    %42 = memref.load %arg3[%c2_20, %c0_21] : memref<3x3xf32, #tpu.memory_space<smem>>
    %43 = vector.broadcast %42 : f32 to vector<1x128xf32>
    %44 = arith.mulf %43, %34 : vector<1x128xf32>
    %45 = arith.addf %41, %44 : vector<1x128xf32>
    %c0_22 = arith.constant 0 : index
    %46 = memref.load %arg4[%c0_22] : memref<3xf32, #tpu.memory_space<smem>>
    %47 = vector.broadcast %46 : f32 to vector<1x128xf32>
    %48 = arith.addf %45, %47 : vector<1x128xf32>
    %49 = arith.negf %48 : vector<1x128xf32>
    %50 = math.exp %49 : vector<1x128xf32>
    %cst = arith.constant 1.000000e+00 : f32
    %51 = vector.broadcast %cst : f32 to vector<1x128xf32>
    %52 = arith.addf %51, %50 : vector<1x128xf32>
    %53 = arith.divf %51, %52 : vector<1x128xf32>
    %c0_23 = arith.constant 0 : index
    %c0_24 = arith.constant 0 : index
    %54 = vector.load %arg6[%c0_23, %c0_24] : memref<3x128xf32, #tpu.memory_space<vmem>>, vector<1x128xf32>
    tpu.vector_store %arg6[%c0_23, %c0_24], %53 {strides = array<i32>} : memref<3x128xf32, #tpu.memory_space<vmem>>, vector<1x128xf32>,
    %c0_25 = arith.constant 0 : index
    %c1_26 = arith.constant 1 : index
    %55 = memref.load %arg3[%c0_25, %c1_26] : memref<3x3xf32, #tpu.memory_space<smem>>
    %56 = vector.broadcast %55 : f32 to vector<1x128xf32>
    %57 = arith.mulf %56, %12 : vector<1x128xf32>
    %c1_27 = arith.constant 1 : index
    %c1_28 = arith.constant 1 : index
    %58 = memref.load %arg3[%c1_27, %c1_28] : memref<3x3xf32, #tpu.memory_space<smem>>
    %59 = vector.broadcast %58 : f32 to vector<1x128xf32>
    %60 = arith.mulf %59, %23 : vector<1x128xf32>
    %61 = arith.addf %57, %60 : vector<1x128xf32>
    %c2_29 = arith.constant 2 : index
    %c1_30 = arith.constant 1 : index
    %62 = memref.load %arg3[%c2_29, %c1_30] : memref<3x3xf32, #tpu.memory_space<smem>>
    %63 = vector.broadcast %62 : f32 to vector<1x128xf32>
    %64 = arith.mulf %63, %34 : vector<1x128xf32>
    %65 = arith.addf %61, %64 : vector<1x128xf32>
    %c1_31 = arith.constant 1 : index
    %66 = memref.load %arg4[%c1_31] : memref<3xf32, #tpu.memory_space<smem>>
    %67 = vector.broadcast %66 : f32 to vector<1x128xf32>
    %68 = arith.addf %65, %67 : vector<1x128xf32>
    %69 = arith.negf %68 : vector<1x128xf32>
    %70 = math.exp %69 : vector<1x128xf32>
    %cst_32 = arith.constant 1.000000e+00 : f32
    %71 = vector.broadcast %cst_32 : f32 to vector<1x128xf32>
    %72 = arith.addf %71, %70 : vector<1x128xf32>
    %73 = arith.divf %71, %72 : vector<1x128xf32>
    %c1_33 = arith.constant 1 : index
    %c0_34 = arith.constant 0 : index
    %74 = vector.load %arg6[%c1_33, %c0_34] : memref<3x128xf32, #tpu.memory_space<vmem>>, vector<1x128xf32>
    tpu.vector_store %arg6[%c1_33, %c0_34], %73 {strides = array<i32>} : memref<3x128xf32, #tpu.memory_space<vmem>>, vector<1x128xf32>,
    %c0_35 = arith.constant 0 : index
    %c2_36 = arith.constant 2 : index
    %75 = memref.load %arg3[%c0_35, %c2_36] : memref<3x3xf32, #tpu.memory_space<smem>>
    %76 = vector.broadcast %75 : f32 to vector<1x128xf32>
    %77 = arith.mulf %76, %12 : vector<1x128xf32>
    %c1_37 = arith.constant 1 : index
    %c2_38 = arith.constant 2 : index
    %78 = memref.load %arg3[%c1_37, %c2_38] : memref<3x3xf32, #tpu.memory_space<smem>>
    %79 = vector.broadcast %78 : f32 to vector<1x128xf32>
    %80 = arith.mulf %79, %23 : vector<1x128xf32>
    %81 = arith.addf %77, %80 : vector<1x128xf32>
    %c2_39 = arith.constant 2 : index
    %c2_40 = arith.constant 2 : index
    %82 = memref.load %arg3[%c2_39, %c2_40] : memref<3x3xf32, #tpu.memory_space<smem>>
    %83 = vector.broadcast %82 : f32 to vector<1x128xf32>
    %84 = arith.mulf %83, %34 : vector<1x128xf32>
    %85 = arith.addf %81, %84 : vector<1x128xf32>
    %c2_41 = arith.constant 2 : index
    %86 = memref.load %arg4[%c2_41] : memref<3xf32, #tpu.memory_space<smem>>
    %87 = vector.broadcast %86 : f32 to vector<1x128xf32>
    %88 = arith.addf %85, %87 : vector<1x128xf32>
    %89 = arith.negf %88 : vector<1x128xf32>
    %90 = math.exp %89 : vector<1x128xf32>
    %cst_42 = arith.constant 1.000000e+00 : f32
    %91 = vector.broadcast %cst_42 : f32 to vector<1x128xf32>
    %92 = arith.addf %91, %90 : vector<1x128xf32>
    %93 = arith.divf %91, %92 : vector<1x128xf32>
    %c2_43 = arith.constant 2 : index
    %c0_44 = arith.constant 0 : index
    %94 = vector.load %arg6[%c2_43, %c0_44] : memref<3x128xf32, #tpu.memory_space<vmem>>, vector<1x128xf32>
    tpu.vector_store %arg6[%c2_43, %c0_44], %93 {strides = array<i32>} : memref<3x128xf32, #tpu.memory_space<vmem>>, vector<1x128xf32>,
    return
  }
  func.func @transform_0(%arg0: i32) -> (i32, i32) {
    %c0_i32 = arith.constant 0 : i32
    %c0_i32_0 = arith.constant 0 : i32
    %c0_i32_1 = arith.constant 0 : i32
    return %c0_i32, %c0_i32_0 : i32, i32
  }
  func.func @transform_1(%arg0: i32) -> i32 {
    %c0_i32 = arith.constant 0 : i32
    %c0_i32_0 = arith.constant 0 : i32
    return %c0_i32 : i32
  }
  func.func @transform_2(%arg0: i32) -> (i32, i32) {
    %c0_i32 = arith.constant 0 : i32
    %c0_i32_0 = arith.constant 0 : i32
    %c0_i32_1 = arith.constant 0 : i32
    return %c0_i32, %c0_i32_0 : i32, i32
  }
  func.func @transform_3(%arg0: i32) -> i32 {
    %c0_i32 = arith.constant 0 : i32
    %c0_i32_0 = arith.constant 0 : i32
    return %c0_i32 : i32
  }
  func.func @transform_4(%arg0: i32) -> (i32, i32) {
    %c0_i32 = arith.constant 0 : i32
    %c0_i32_0 = arith.constant 0 : i32
    return %c0_i32, %arg0 : i32, i32
  }
  func.func @transform_5(%arg0: i32) -> (i32, i32) {
    %c0_i32 = arith.constant 0 : i32
    %c0_i32_0 = arith.constant 0 : i32
    return %c0_i32, %arg0 : i32, i32
  }
}

</mosaic_0001>

<llo_original>
// kernel: tpu_custom_call.1
$region0: #{tpu_custom_call.1}
  #allocation0 [shape = 'u32[]', space=smem, size = 0x4, offset = 0x4, fixed_abs, tag = 'smem constant byte address 0x4 - core index']
  #allocation1 [shape = 'u32[144,128]{1,0:T(1,128)}', space=vmem, size = 0x12000, scoped, tag = 'internal scratch']
  %s0 = inlined_call_operand.hbm [shape: f32[2,3], index: 0, kind: input, shape index: {}]
  %s1 = inlined_call_operand.vmem [shape: f32[3], index: 1, kind: input, shape index: {}]
  %s2 = inlined_call_operand.hbm [shape: f32[3,3], index: 2, kind: input, shape index: {}]
  %s3 = inlined_call_operand.vmem [shape: f32[3], index: 3, kind: input, shape index: {}]
  %s4 = inlined_call_operand.vmem [shape: f32[2,128], index: 4, kind: input, shape index: {}]
  %s5 = inlined_call_operand.hbm [shape: f32[3,128], index: 5, kind: output, shape index: {}]
  %s6 = sld [smem:[#allocation0]]
  $region46: #{tpu_custom_call.1} parent=0
    _
  %s8 = ssub.s32 1, %s6
  %s9 = scalar_select 0, %s8, %s6
  $region1: #{tpu_custom_call.1} parent=0
    #allocation2 [shape = 'u8[1024]{0}', space=smem, size = 0x400, scoped, tag = 'input window, operand 0, single buffered']
    #allocation3 [shape = 's32[1]{0}', space=sflag, size = 0x4, scoped, tag = 'scoped memory for tpu_custom_call.1']
    #allocation4 [shape = 's32[1]{0}', space=sflag, size = 0x4, scoped, tag = 'scoped memory for tpu_custom_call.1']
    #allocation5 [shape = 's32[1]{0}', space=sflag, size = 0x4, scoped, tag = 'scoped memory for tpu_custom_call.1']
    #allocation6 [shape = 'u8[512]{0}', space=smem, size = 0x200, scoped, tag = 'input window, operand 1, single buffered']
    #allocation7 [shape = 'u8[2048]{0}', space=smem, size = 0x800, scoped, tag = 'input window, operand 2, single buffered']
    #allocation8 [shape = 's32[1]{0}', space=sflag, size = 0x4, scoped, tag = 'scoped memory for tpu_custom_call.1']
    #allocation9 [shape = 'u8[512]{0}', space=smem, size = 0x200, scoped, tag = 'input window, operand 3, single buffered']
    #allocation10 [shape = 's32[1]{0}', space=sflag, size = 0x4, scoped, tag = 'scoped memory for tpu_custom_call.1']
    #allocation11 [shape = 'u8[2048]{0}', space=vmem, size = 0x800, scoped, tag = 'output window, operand 0, single buffered']
    %10 = vsyncpa [#allocation4], 0
    %11 = vsyncpa [#allocation5], 0
    %12 = vsyncpa [#allocation8], 0
    %13 = vsyncpa [#allocation10], 0
    %14 = vsyncpa [#allocation3], 0
    // Predicated region
    $region2: #{tpu_custom_call.1} parent=1 // pred_check
      _
    $region3: #{tpu_custom_call.1} parent=1 // pred_check_branch
      %16 = sbr.rel (0) target = $region5
    $region4: #{tpu_custom_call.1} parent=1 // pred_region
      %s18 = ssub.s32 32, 32
      %19 = vsyncadd [#allocation4], %s18
      %22 = dma.hbm_to_smem %s0, 32, [#allocation2], [#allocation4]
    $region5: #{tpu_custom_call.1} parent=1 // pred_fallthru
      _
    // Predicated region
    $region6: #{tpu_custom_call.1} parent=1 // pred_check
      _
    $region7: #{tpu_custom_call.1} parent=1 // pred_check_branch
      %24 = sbr.rel (0) target = $region9
    $region8: #{tpu_custom_call.1} parent=1 // pred_region
      %s26 = ssub.s32 16, 16
      %27 = vsyncadd [#allocation5], %s26
      %s29 = sshll.u32 %s1, 4
      %s30 = int_to_ptr.vmem [resolvable:$true] %s29
      %32 = dma.vmem_to_smem %s30, 16, [#allocation6], [#allocation5]
    $region9: #{tpu_custom_call.1} parent=1 // pred_fallthru
      _
    // Predicated region
    $region10: #{tpu_custom_call.1} parent=1 // pred_check
      _
    $region11: #{tpu_custom_call.1} parent=1 // pred_check_branch
      %34 = sbr.rel (0) target = $region13
    $region12: #{tpu_custom_call.1} parent=1 // pred_region
      %s36 = ssub.s32 64, 64
      %37 = vsyncadd [#allocation8], %s36
      %40 = dma.hbm_to_smem %s2, 64, [#allocation7], [#allocation8]
    $region13: #{tpu_custom_call.1} parent=1 // pred_fallthru
      _
    // Predicated region
    $region14: #{tpu_custom_call.1} parent=1 // pred_check
      _
    $region15: #{tpu_custom_call.1} parent=1 // pred_check_branch
      %42 = sbr.rel (0) target = $region17
    $region16: #{tpu_custom_call.1} parent=1 // pred_region
      %s44 = ssub.s32 16, 16
      %45 = vsyncadd [#allocation10], %s44
      %s47 = sshll.u32 %s3, 4
      %s48 = int_to_ptr.vmem [resolvable:$true] %s47
      %50 = dma.vmem_to_smem %s48, 16, [#allocation9], [#allocation10]
    $region17: #{tpu_custom_call.1} parent=1 // pred_fallthru
      _
    // Predicated region
    $region18: #{tpu_custom_call.1} parent=1 // pred_check
      _
    $region19: #{tpu_custom_call.1} parent=1 // pred_check_branch
      %52 = sbr.rel (0) target = $region21
    $region20: #{tpu_custom_call.1} parent=1 // pred_region
      _
    $region21: #{tpu_custom_call.1} parent=1 // pred_fallthru
      _
    // Predicated region
    $region22: #{tpu_custom_call.1} parent=1 // pred_check
      _
    $region23: #{tpu_custom_call.1} parent=1 // pred_check_branch
      %54 = sbr.rel (0) target = $region25
    $region24: #{tpu_custom_call.1} parent=1 // pred_region
      %55 = dma.done [#allocation4], 32
    $region25: #{tpu_custom_call.1} parent=1 // pred_fallthru
      _
    // Predicated region
    $region26: #{tpu_custom_call.1} parent=1 // pred_check
      _
    $region27: #{tpu_custom_call.1} parent=1 // pred_check_branch
      %57 = sbr.rel (0) target = $region29
    $region28: #{tpu_custom_call.1} parent=1 // pred_region
      %58 = dma.done [#allocation5], 16
    $region29: #{tpu_custom_call.1} parent=1 // pred_fallthru
      _
    // Predicated region
    $region30: #{tpu_custom_call.1} parent=1 // pred_check
      _
    $region31: #{tpu_custom_call.1} parent=1 // pred_check_branch
      %60 = sbr.rel (0) target = $region33
    $region32: #{tpu_custom_call.1} parent=1 // pred_region
      %61 = dma.done [#allocation8], 64
    $region33: #{tpu_custom_call.1} parent=1 // pred_fallthru
      _
    // Predicated region
    $region34: #{tpu_custom_call.1} parent=1 // pred_check
      _
    $region35: #{tpu_custom_call.1} parent=1 // pred_check_branch
      %63 = sbr.rel (0) target = $region37
    $region36: #{tpu_custom_call.1} parent=1 // pred_region
      %64 = dma.done [#allocation10], 16
    $region37: #{tpu_custom_call.1} parent=1 // pred_fallthru
      _
    %65 = sfence
    %v66 = vld [vmem:[%s4] sm:$0x1]
    %v67 = vld [vmem:[%s4 + $0x1] sm:$0x1]
    %s68 = sld [smem:[#allocation2]]
    %v69 = vstv %s68
    %v70 = vmul.f32 %v69, %v66
    %s71 = sld [smem:[#allocation2 + $0x80]]
    %v72 = vstv %s71
    %v73 = vmul.f32 %v72, %v67
    %v74 = vadd.f32 %v70, %v73
    %s75 = sld [smem:[#allocation6]]
    %v76 = vstv %s75
    %v77 = vadd.f32 %v74, %v76
    %v78 = vtanh.pop %v77
    %s79 = sld [smem:[#allocation2 + $0x1]]
    %v80 = vstv %s79
    %v81 = vmul.f32 %v80, %v66
    %s82 = sld [smem:[#allocation2 + $0x81]]
    %v83 = vstv %s82
    %v84 = vmul.f32 %v83, %v67
    %v85 = vadd.f32 %v81, %v84
    %s86 = sld [smem:[#allocation6 + $0x1]]
    %v87 = vstv %s86
    %v88 = vadd.f32 %v85, %v87
    %v89 = vtanh.pop %v88
    %s90 = sld [smem:[#allocation2 + $0x2]]
    %v91 = vstv %s90
    %v92 = vmul.f32 %v91, %v66
    %s93 = sld [smem:[#allocation2 + $0x82]]
    %v94 = vstv %s93
    %v95 = vmul.f32 %v94, %v67
    %v96 = vadd.f32 %v92, %v95
    %s97 = sld [smem:[#allocation6 + $0x2]]
    %v98 = vstv %s97
    %v99 = vadd.f32 %v96, %v98
    %v100 = vtanh.pop %v99
    %s101 = sld [smem:[#allocation7]]
    %v102 = vstv %s101
    %v103 = vmul.f32 %v102, %v78
    %s104 = sld [smem:[#allocation7 + $0x80]]
    %v105 = vstv %s104
    %v106 = vmul.f32 %v105, %v89
    %v107 = vadd.f32 %v103, %v106
    %s108 = sld [smem:[#allocation7 + $0x100]]
    %v109 = vstv %s108
    %v110 = vmul.f32 %v109, %v100
    %v111 = vadd.f32 %v107, %v110
    %s112 = sld [smem:[#allocation9]]
    %v113 = vstv %s112
    %v114 = vadd.f32 %v111, %v113
    %v115 = vxor.u32 %v114, 2147483648
    %v116 = vmul.f32 %v115, 1.442695
    %v117 = vpow.pop %v116
    %v118 = vadd.f32 %v117, 1.0
    %v119 = vrcp.pop %v118
    %v120 = vmul.f32 1.0, %v119
    %121 = vst [vmem:[#allocation11] sm:$0x1] %v120
    %s122 = sld [smem:[#allocation7 + $0x1]]
    %v123 = vstv %s122
    %v124 = vmul.f32 %v123, %v78
    %s125 = sld [smem:[#allocation7 + $0x81]]
    %v126 = vstv %s125
    %v127 = vmul.f32 %v126, %v89
    %v128 = vadd.f32 %v124, %v127
    %s129 = sld [smem:[#allocation7 + $0x101]]
    %v130 = vstv %s129
    %v131 = vmul.f32 %v130, %v100
    %v132 = vadd.f32 %v128, %v131
    %s133 = sld [smem:[#allocation9 + $0x1]]
    %v134 = vstv %s133
    %v135 = vadd.f32 %v132, %v134
    %v136 = vxor.u32 %v135, 2147483648
    %v137 = vmul.f32 %v136, 1.442695
    %v138 = vpow.pop %v137
    %v139 = vadd.f32 %v138, 1.0
    %v140 = vrcp.pop %v139
    %v141 = vmul.f32 1.0, %v140
    %142 = vst [vmem:[#allocation11 + $0x1] sm:$0x1] %v141
    %s143 = sld [smem:[#allocation7 + $0x2]]
    %v144 = vstv %s143
    %v145 = vmul.f32 %v144, %v78
    %s146 = sld [smem:[#allocation7 + $0x82]]
    %v147 = vstv %s146
    %v148 = vmul.f32 %v147, %v89
    %v149 = vadd.f32 %v145, %v148
    %s150 = sld [smem:[#allocation7 + $0x102]]
    %v151 = vstv %s150
    %v152 = vmul.f32 %v151, %v100
    %v153 = vadd.f32 %v149, %v152
    %s154 = sld [smem:[#allocation9 + $0x2]]
    %v155 = vstv %s154
    %v156 = vadd.f32 %v153, %v155
    %v157 = vxor.u32 %v156, 2147483648
    %v158 = vmul.f32 %v157, 1.442695
    %v159 = vpow.pop %v158
    %v160 = vadd.f32 %v159, 1.0
    %v161 = vrcp.pop %v160
    %v162 = vmul.f32 1.0, %v161
    %163 = vst [vmem:[#allocation11 + $0x2] sm:$0x1] %v162
    // Predicated region
    $region38: #{tpu_custom_call.1} parent=1 // pred_check
      _
    $region39: #{tpu_custom_call.1} parent=1 // pred_check_branch
      %165 = sbr.rel (0) target = $region41
    $region40: #{tpu_custom_call.1} parent=1 // pred_region
      %s167 = ssub.s32 64, 64
      %168 = vsyncadd [#allocation3], %s167
      %s170 = sshll.u32 [#allocation11], 4
      %s171 = int_to_ptr.vmem [resolvable:$true] %s170
      %173 = dma.vmem_to_hbm [thread:$0]  %s171, 64, %s5, [#allocation3]
    $region41: #{tpu_custom_call.1} parent=1 // pred_fallthru
      _
    // Predicated region
    $region42: #{tpu_custom_call.1} parent=1 // pred_check
      _
    $region43: #{tpu_custom_call.1} parent=1 // pred_check_branch
      %175 = sbr.rel (0) target = $region45
    $region44: #{tpu_custom_call.1} parent=1 // pred_region
      %176 = dma.done [#allocation3], 64
    $region45: #{tpu_custom_call.1} parent=1 // pred_fallthru
      _
    %177 = vsyncpa [#allocation3], 1
    %178 = vsyncpa [#allocation4], 1
    %179 = vsyncpa [#allocation8], 1
    %180 = vsyncpa [#allocation5], 1
    %181 = vsyncpa [#allocation10], 1

</llo_original>
